<compile_context>
chip_gen: v7x
topology: tpu7x:2x2x1
jax: 0.10.0
libtpu: 0.0.40
codegen_flags: <defaults>
</compile_context>

<pallas_src>
import functools

import jax
import jax.numpy as jnp
from jax.experimental import pallas as pl
from jax.experimental.pallas import tpu as pltpu

# Module hyper-parameters (from ConvResidualBlock.__init__).
IN_OUT_CHANNELS = 32
KERNEL_SIZE = 3
DILATION = 2
N_BLOCKS = 2
EPS = 1e-5
LANES = 128  # vreg lane width


def _mish(x):
    """x * tanh(softplus(x)) with one exp.

    tanh(log1p(e^x)) = t(t+2)/(t(t+2)+2), t = e^x (exact identity).  Keeps
    PyTorch's softplus threshold-20 fast path; exp is clamped so the unused
    branch never overflows.  Exact divide kept (approx reciprocal is not
    safely inside the 1e-4 test tolerance).
    """
    t = jnp.exp(jnp.minimum(x, 20.0))
    q = t * (t + 2.0)
    return jnp.where(x > 20.0, x, x * q / (q + 2.0))


def conv_residual_block_kernel(x_ref, w_ref, b_ref, g_ref, beta_ref, o_ref, *,
                               group, channels, time, deltas, n_blocks,
                               begin, end):
    """Whole forward pass on one lane-dense (B*T/G, G*C) slab resident in VMEM."""
    rows, gc = x_ref.shape                    # (B*T/G, G*C)
    G, C, T = group, channels, time
    Gb = T // G                               # grouped rows per batch element
    inv_n = 1.0 / (rows * G)                  # 1 / (B*T)

    # Interior-time mask (conv-output positions surviving ZeroTemporalPad),
    # built once and reused by both blocks.  pos = time*C + channel within a
    # batch element; interior  <=>  begin <= time < T - end.
    local_g = jax.lax.broadcasted_iota(
        jnp.int32, (rows // Gb, Gb, 1), 1).reshape(rows, 1)     # batch-local group row
    lane = jax.lax.broadcasted_iota(jnp.int32, (1, gc), 1)
    pos = local_g * gc + lane
    interior = jnp.logical_and(pos >= begin * C, pos < (T - end) * C)

    def lane_tile(v):                         # (1, C) -> (1, G*C), channel-minor
        return v if G == 1 else jnp.concatenate([v] * G, axis=1)

    def group_sum(v):                         # (1, G*C) -> (1, C)
        acc = v[:, 0:C]
        for j in range(1, G):
            acc = acc + v[:, j * C:(j + 1) * C]
        return acc

    # Carried activation, lane-dense (B*T/G, 128).
    h = x_ref[...].astype(jnp.float32)

    for blk in range(n_blocks):
        # ---- dilated Conv1d + ZeroTemporalPad as one banded matmul ------------
        # tap for group-row offset d is h[r+d], realized as a whole-row sublane
        # roll; wrapped rows only ever land in masked output positions.
        taps = [h if dlt == 0 else jnp.roll(h, -dlt, axis=0) for dlt in deltas]
        lhs = taps[0] if len(taps) == 1 else jnp.concatenate(taps, axis=1)
        conv = jnp.dot(lhs, w_ref[blk],
                       preferred_element_type=jnp.float32) + b_ref[blk]
        m = _mish(jnp.where(interior, conv, 0.0))   # padded rows are exactly 0

        # ---- FreqNorm: BatchNorm1d training stats, per channel over (B, T) ----
        mean_c = group_sum(jnp.sum(m, axis=0, keepdims=True)) * inv_n   # (1, C)
        dev = m - lane_tile(mean_c)
        var_c = group_sum(jnp.sum(dev * dev, axis=0, keepdims=True)) * inv_n
        scale = lane_tile(jax.lax.rsqrt(var_c + EPS)) * g_ref[blk]
        h = dev * scale + beta_ref[blk]

    # ---- residual: x re-read from VMEM here, not held live across blocks -----
    o_ref[...] = (x_ref[...].astype(jnp.float32) + h).astype(o_ref.dtype)


def _fused_conv_weights(weights, group, dilation):
    """Fold the K conv taps and the G in-row time positions into one banded
    (n_taps*G*C, G*C) weight per block.  Row index = tap_group*G*C + src_pos*C
    + c_in, col index = out_pos*C + c_out (matches the kernel's lane layout)."""
    n_blocks, K, C, _ = weights.shape
    G = group
    total_pad = dilation * (K - 1)
    begin = total_pad // 2
    end = total_pad - begin
    offs = [j + k * dilation - begin for j in range(G) for k in range(K)]
    d_min = min(o // G for o in offs)
    d_max = max(o // G for o in offs)
    deltas = tuple(range(d_min, d_max + 1))
    w_big = jnp.zeros((n_blocks, len(deltas) * G * C, G * C), jnp.float32)
    for j in range(G):                         # output time position within a row
        for k in range(K):                     # conv tap
            off = j + k * dilation - begin     # source time offset within the row
            mg, p = off // G - d_min, off % G  # (tap group, source position)
            w_big = w_big.at[:, mg * G * C + p * C:mg * G * C + (p + 1) * C,
                             j * C:(j + 1) * C].set(weights[:, k])
    return w_big, deltas, begin, end


def conv_residual_block(x, weights, biases, gammas, betas):
    """x: (B, T, C) f32.  weights: (n, K, C_in, C_out) (PyTorch (C_out,C_in,K)
    transposed).  biases / gammas / betas: (n, 1, C)."""
    B, T, C = x.shape
    n_blocks = weights.shape[0]

    # Lane-densification factor: G consecutive time steps per 128-lane row.
    G = LANES // C if (C < LANES and LANES % C == 0) else 1
    while T % G != 0:
        G //= 2
    GC = G * C
    rows = (B * T) // G

    w_big, deltas, begin, end = _fused_conv_weights(weights, G, DILATION)
    # Pre-tile per-channel vectors to the G*C lane layout (lane j*C+c -> v[c]).
    b_t = jnp.tile(biases, (1, 1, G))
    g_t = jnp.tile(gammas, (1, 1, G))
    beta_t = jnp.tile(betas, (1, 1, G))
    x_g = x.reshape(rows, GC)                 # contiguous, layout-preserving

    # Per-generation VMEM budget (review item 3): ~75% of physical, <= 100 MiB.
    try:
        vmem_cap = int(pltpu.get_tpu_info().vmem_capacity_bytes)
    except Exception:
        vmem_cap = 64 * 1024 * 1024           # conservative (v7x-sized) default
    vmem_limit = max(32 * 1024 * 1024,
                     min(vmem_cap * 3 // 4, 100 * 1024 * 1024))

    # Rough live-VMEM estimate for the fused whole-slab form: x + h + taps/lhs
    # + conv/mish temps + out, plus the fused weights.
    slab = 4 * rows * GC
    est_live = (6 + len(deltas)) * slab + 4 * w_big.size
    # TODO(synk): switch to the batch-tiled two-pass path (see header) instead
    #             of asserting once slabs outgrow VMEM.
    assert est_live < vmem_limit, (est_live, vmem_limit)

    kernel = functools.partial(conv_residual_block_kernel,
                               group=G, channels=C, time=T, deltas=deltas,
                               n_blocks=n_blocks, begin=begin, end=end)
    vmem = pl.BlockSpec(memory_space=pltpu.MemorySpace.VMEM)

    flops = n_blocks * (2 * rows * (len(deltas) * GC) * GC + 16 * rows * GC)
    transcendentals = n_blocks * 2 * rows * GC
    bytes_accessed = 4 * (2 * rows * GC + n_blocks * (len(deltas) * GC * GC + 3 * GC))

    out_g = pl.pallas_call(
        kernel,
        out_shape=jax.ShapeDtypeStruct((rows, GC), x.dtype),
        in_specs=[vmem] * 5,
        out_specs=vmem,
        compiler_params=pltpu.CompilerParams(vmem_limit_bytes=vmem_limit),
        cost_estimate=pl.CostEstimate(flops=flops,
                                      transcendentals=transcendentals,
                                      bytes_accessed=bytes_accessed),
    )(x_g, w_big, b_t, g_t, beta_t)
    return out_g.reshape(B, T, C)


def reference(x, weights, biases, gammas, betas):
    """Pure-JAX reference mirroring the PyTorch module forward (training mode)."""
    total_pad = DILATION * (KERNEL_SIZE - 1)
    begin = total_pad // 2
    end = total_pad - begin
    h = x
    for blk in range(N_BLOCKS):
        conv = jax.lax.conv_general_dilated(
            h, weights[blk], window_strides=(1,), padding='VALID',
            rhs_dilation=(DILATION,),
            dimension_numbers=('NWC', 'WIO', 'NWC'))
        conv = conv + biases[blk][None]
        padded = jnp.pad(conv, ((0, 0), (begin, end), (0, 0)))
        m = padded * jnp.tanh(jax.nn.softplus(padded))
        mean = jnp.mean(m, axis=(0, 1), keepdims=True)
        var = jnp.var(m, axis=(0, 1), keepdims=True)
        h = (m - mean) / jnp.sqrt(var + EPS)
        h = h * gammas[blk][None] + betas[blk][None]
    return x + h


if __name__ == "__main__":
    key = jax.random.PRNGKey(0)
    kx, kw, kb, kg, kbeta = jax.random.split(key, 5)

    B, T, C = 2, 16, IN_OUT_CHANNELS
    x = jax.random.normal(kx, (B, T, C), jnp.float32)

    # Deterministic synthetic parameters (shapes from the module __init__):
    # conv weight per block: (kernel_size, C_in, C_out) [PyTorch (C_out,C_in,K) transposed]
    weights = 0.1 * jax.random.normal(kw, (N_BLOCKS, KERNEL_SIZE, C, C), jnp.float32)
    biases = 0.1 * jax.random.normal(kb, (N_BLOCKS, 1, C), jnp.float32)
    gammas = 1.0 + 0.1 * jax.random.normal(kg, (N_BLOCKS, 1, C), jnp.float32)
    betas = 0.1 * jax.random.normal(kbeta, (N_BLOCKS, 1, C), jnp.float32)

    out = jax.block_until_ready(conv_residual_block(x, weights, biases, gammas, betas))
    ref = reference(x, weights, biases, gammas, betas)

    assert out.shape == (B, T, C) and out.dtype == jnp.float32
    max_err = float(jnp.max(jnp.abs(out - ref)))
    assert jnp.allclose(out, ref, atol=1e-4, rtol=1e-4), max_err

    print("KERNEL_OK")
</pallas_src>

<mosaic_0001>
module attributes {stable_mosaic.version = 11 : i64} {
  func.func @conv_residual_block_kernel(%arg0: memref<8x128xf32, #tpu.memory_space<vmem>>, %arg1: memref<2x384x128xf32, #tpu.memory_space<vmem>>, %arg2: memref<2x1x128xf32, #tpu.memory_space<vmem>>, %arg3: memref<2x1x128xf32, #tpu.memory_space<vmem>>, %arg4: memref<2x1x128xf32, #tpu.memory_space<vmem>>, %arg5: memref<8x128xf32, #tpu.memory_space<vmem>>) attributes {dimension_semantics = [], scalar_prefetch = 0 : i64, scratch_operands = 0 : i64, tpu.core_type = #tpu.core_type<tc>} {
    %0 = tpu.iota {dimensions = array<i32: 1>} : vector<2x4x1xi32>
    %1 = vector.shape_cast %0 : vector<2x4x1xi32> to vector<8x1xi32>
    %2 = tpu.iota {dimensions = array<i32: 1>} : vector<1x128xi32>
    %c128_i32 = arith.constant 128 : i32
    %3 = vector.broadcast %c128_i32 : i32 to vector<8x1xi32>
    %4 = arith.muli %1, %3 : vector<8x1xi32>
    %5 = vector.broadcast %4 : vector<8x1xi32> to vector<8x128xi32>
    %6 = vector.broadcast %2 : vector<1x128xi32> to vector<8x128xi32>
    %7 = arith.addi %5, %6 : vector<8x128xi32>
    %c64_i32 = arith.constant 64 : i32
    %8 = vector.broadcast %c64_i32 : i32 to vector<8x128xi32>
    %9 = arith.cmpi sge, %7, %8 : vector<8x128xi32>
    %c448_i32 = arith.constant 448 : i32
    %10 = vector.broadcast %c448_i32 : i32 to vector<8x128xi32>
    %11 = arith.cmpi slt, %7, %10 : vector<8x128xi32>
    %12 = arith.andi %9, %11 : vector<8x128xi1>
    %c0 = arith.constant 0 : index
    %c0_0 = arith.constant 0 : index
    %13 = vector.load %arg0[%c0, %c0_0] : memref<8x128xf32, #tpu.memory_space<vmem>>, vector<8x128xf32>
    %14 = vector.extract_strided_slice %13 {offsets = [7, 0], sizes = [1, 128], strides = [1, 1]} : vector<8x128xf32> to vector<1x128xf32>
    %15 = vector.extract_strided_slice %13 {offsets = [0, 0], sizes = [7, 128], strides = [1, 1]} : vector<8x128xf32> to vector<7x128xf32>
    %16 = tpu.concatenate %14, %15 in 0 : vector<1x128xf32>, vector<7x128xf32> -> vector<8x128xf32>
    %17 = vector.extract_strided_slice %13 {offsets = [1, 0], sizes = [7, 128], strides = [1, 1]} : vector<8x128xf32> to vector<7x128xf32>
    %18 = vector.extract_strided_slice %13 {offsets = [0, 0], sizes = [1, 128], strides = [1, 1]} : vector<8x128xf32> to vector<1x128xf32>
    %19 = tpu.concatenate %17, %18 in 0 : vector<7x128xf32>, vector<1x128xf32> -> vector<8x128xf32>
    %20 = tpu.concatenate %16, %13, %19 in 1 : vector<8x128xf32>, vector<8x128xf32>, vector<8x128xf32> -> vector<8x384xf32>
    %c0_1 = arith.constant 0 : index
    %c0_2 = arith.constant 0 : index
    %c0_3 = arith.constant 0 : index
    %21 = vector.load %arg1[%c0_1, %c0_2, %c0_3] : memref<2x384x128xf32, #tpu.memory_space<vmem>>, vector<1x384x128xf32>
    %22 = vector.shape_cast %21 : vector<1x384x128xf32> to vector<384x128xf32>
    %cst = arith.constant dense<0.000000e+00> : vector<8x128xf32>
    %23 = tpu.matmul %20, %22, %cst {dimension_numbers = #tpu.dot_dimension_numbers<[1], [0], [0], [1], [0, 0, 1, 1], [], []>} : vector<8x384xf32>, vector<384x128xf32>, vector<8x128xf32> -> vector<8x128xf32>
    %c0_4 = arith.constant 0 : index
    %c0_5 = arith.constant 0 : index
    %c0_6 = arith.constant 0 : index
    %24 = vector.load %arg2[%c0_4, %c0_5, %c0_6] : memref<2x1x128xf32, #tpu.memory_space<vmem>>, vector<1x1x128xf32>
    %25 = vector.shape_cast %24 : vector<1x1x128xf32> to vector<1x128xf32>
    %26 = vector.broadcast %25 : vector<1x128xf32> to vector<8x128xf32>
    %27 = arith.addf %23, %26 : vector<8x128xf32>
    %cst_7 = arith.constant 0.000000e+00 : f32
    %28 = vector.broadcast %cst_7 : f32 to vector<8x128xf32>
    %29 = arith.select %12, %27, %28 : vector<8x128xi1>, vector<8x128xf32>
    %cst_8 = arith.constant 2.000000e+01 : f32
    %30 = vector.broadcast %cst_8 : f32 to vector<8x128xf32>
    %31 = arith.minimumf %29, %30 : vector<8x128xf32>
    %32 = math.exp %31 : vector<8x128xf32>
    %cst_9 = arith.constant 2.000000e+00 : f32
    %33 = vector.broadcast %cst_9 : f32 to vector<8x128xf32>
    %34 = arith.addf %32, %33 : vector<8x128xf32>
    %35 = arith.mulf %32, %34 : vector<8x128xf32>
    %cst_10 = arith.constant 2.000000e+01 : f32
    %36 = vector.broadcast %cst_10 : f32 to vector<8x128xf32>
    %37 = arith.cmpf ogt, %29, %36 : vector<8x128xf32>
    %38 = arith.mulf %29, %35 : vector<8x128xf32>
    %cst_11 = arith.constant 2.000000e+00 : f32
    %39 = vector.broadcast %cst_11 : f32 to vector<8x128xf32>
    %40 = arith.addf %35, %39 : vector<8x128xf32>
    %41 = arith.divf %38, %40 : vector<8x128xf32>
    %42 = arith.select %37, %29, %41 : vector<8x128xi1>, vector<8x128xf32>
    %cst_12 = arith.constant dense<0.000000e+00> : vector<128xf32>
    %43 = vector.multi_reduction <add>, %42, %cst_12 [0] : vector<8x128xf32> to vector<128xf32>
    %44 = vector.shape_cast %43 : vector<128xf32> to vector<1x128xf32>
    %45 = vector.extract_strided_slice %44 {offsets = [0, 0], sizes = [1, 32], strides = [1, 1]} : vector<1x128xf32> to vector<1x32xf32>
    %46 = vector.extract_strided_slice %44 {offsets = [0, 32], sizes = [1, 32], strides = [1, 1]} : vector<1x128xf32> to vector<1x32xf32>
    %47 = arith.addf %45, %46 : vector<1x32xf32>
    %48 = vector.extract_strided_slice %44 {offsets = [0, 64], sizes = [1, 32], strides = [1, 1]} : vector<1x128xf32> to vector<1x32xf32>
    %49 = arith.addf %47, %48 : vector<1x32xf32>
    %50 = vector.extract_strided_slice %44 {offsets = [0, 96], sizes = [1, 32], strides = [1, 1]} : vector<1x128xf32> to vector<1x32xf32>
    %51 = arith.addf %49, %50 : vector<1x32xf32>
    %cst_13 = arith.constant 3.125000e-02 : f32
    %52 = vector.broadcast %cst_13 : f32 to vector<1x32xf32>
    %53 = arith.mulf %51, %52 : vector<1x32xf32>
    %54 = tpu.concatenate %53, %53, %53, %53 in 1 : vector<1x32xf32>, vector<1x32xf32>, vector<1x32xf32>, vector<1x32xf32> -> vector<1x128xf32>
    %55 = vector.broadcast %54 : vector<1x128xf32> to vector<8x128xf32>
    %56 = arith.subf %42, %55 : vector<8x128xf32>
    %57 = arith.mulf %56, %56 : vector<8x128xf32>
    %cst_14 = arith.constant dense<0.000000e+00> : vector<128xf32>
    %58 = vector.multi_reduction <add>, %57, %cst_14 [0] : vector<8x128xf32> to vector<128xf32>
    %59 = vector.shape_cast %58 : vector<128xf32> to vector<1x128xf32>
    %60 = vector.extract_strided_slice %59 {offsets = [0, 0], sizes = [1, 32], strides = [1, 1]} : vector<1x128xf32> to vector<1x32xf32>
    %61 = vector.extract_strided_slice %59 {offsets = [0, 32], sizes = [1, 32], strides = [1, 1]} : vector<1x128xf32> to vector<1x32xf32>
    %62 = arith.addf %60, %61 : vector<1x32xf32>
    %63 = vector.extract_strided_slice %59 {offsets = [0, 64], sizes = [1, 32], strides = [1, 1]} : vector<1x128xf32> to vector<1x32xf32>
    %64 = arith.addf %62, %63 : vector<1x32xf32>
    %65 = vector.extract_strided_slice %59 {offsets = [0, 96], sizes = [1, 32], strides = [1, 1]} : vector<1x128xf32> to vector<1x32xf32>
    %66 = arith.addf %64, %65 : vector<1x32xf32>
    %cst_15 = arith.constant 3.125000e-02 : f32
    %67 = vector.broadcast %cst_15 : f32 to vector<1x32xf32>
    %68 = arith.mulf %66, %67 : vector<1x32xf32>
    %cst_16 = arith.constant 9.99999974E-6 : f32
    %69 = vector.broadcast %cst_16 : f32 to vector<1x32xf32>
    %70 = arith.addf %68, %69 : vector<1x32xf32>
    %71 = math.rsqrt %70 : vector<1x32xf32>
    %72 = tpu.concatenate %71, %71, %71, %71 in 1 : vector<1x32xf32>, vector<1x32xf32>, vector<1x32xf32>, vector<1x32xf32> -> vector<1x128xf32>
    %c0_17 = arith.constant 0 : index
    %c0_18 = arith.constant 0 : index
    %c0_19 = arith.constant 0 : index
    %73 = vector.load %arg3[%c0_17, %c0_18, %c0_19] : memref<2x1x128xf32, #tpu.memory_space<vmem>>, vector<1x1x128xf32>
    %74 = vector.shape_cast %73 : vector<1x1x128xf32> to vector<1x128xf32>
    %75 = arith.mulf %72, %74 : vector<1x128xf32>
    %76 = vector.broadcast %75 : vector<1x128xf32> to vector<8x128xf32>
    %77 = arith.mulf %56, %76 : vector<8x128xf32>
    %c0_20 = arith.constant 0 : index
    %c0_21 = arith.constant 0 : index
    %c0_22 = arith.constant 0 : index
    %78 = vector.load %arg4[%c0_20, %c0_21, %c0_22] : memref<2x1x128xf32, #tpu.memory_space<vmem>>, vector<1x1x128xf32>
    %79 = vector.shape_cast %78 : vector<1x1x128xf32> to vector<1x128xf32>
    %80 = vector.broadcast %79 : vector<1x128xf32> to vector<8x128xf32>
    %81 = arith.addf %77, %80 : vector<8x128xf32>
    %82 = vector.extract_strided_slice %81 {offsets = [7, 0], sizes = [1, 128], strides = [1, 1]} : vector<8x128xf32> to vector<1x128xf32>
    %83 = vector.extract_strided_slice %81 {offsets = [0, 0], sizes = [7, 128], strides = [1, 1]} : vector<8x128xf32> to vector<7x128xf32>
    %84 = tpu.concatenate %82, %83 in 0 : vector<1x128xf32>, vector<7x128xf32> -> vector<8x128xf32>
    %85 = vector.extract_strided_slice %81 {offsets = [1, 0], sizes = [7, 128], strides = [1, 1]} : vector<8x128xf32> to vector<7x128xf32>
    %86 = vector.extract_strided_slice %81 {offsets = [0, 0], sizes = [1, 128], strides = [1, 1]} : vector<8x128xf32> to vector<1x128xf32>
    %87 = tpu.concatenate %85, %86 in 0 : vector<7x128xf32>, vector<1x128xf32> -> vector<8x128xf32>
    %88 = tpu.concatenate %84, %81, %87 in 1 : vector<8x128xf32>, vector<8x128xf32>, vector<8x128xf32> -> vector<8x384xf32>
    %c1 = arith.constant 1 : index
    %c0_23 = arith.constant 0 : index
    %c0_24 = arith.constant 0 : index
    %89 = vector.load %arg1[%c1, %c0_23, %c0_24] : memref<2x384x128xf32, #tpu.memory_space<vmem>>, vector<1x384x128xf32>
    %90 = vector.shape_cast %89 : vector<1x384x128xf32> to vector<384x128xf32>
    %cst_25 = arith.constant dense<0.000000e+00> : vector<8x128xf32>
    %91 = tpu.matmul %88, %90, %cst_25 {dimension_numbers = #tpu.dot_dimension_numbers<[1], [0], [0], [1], [0, 0, 1, 1], [], []>} : vector<8x384xf32>, vector<384x128xf32>, vector<8x128xf32> -> vector<8x128xf32>
    %c1_26 = arith.constant 1 : index
    %c0_27 = arith.constant 0 : index
    %c0_28 = arith.constant 0 : index
    %92 = vector.load %arg2[%c1_26, %c0_27, %c0_28] : memref<2x1x128xf32, #tpu.memory_space<vmem>>, vector<1x1x128xf32>
    %93 = vector.shape_cast %92 : vector<1x1x128xf32> to vector<1x128xf32>
    %94 = vector.broadcast %93 : vector<1x128xf32> to vector<8x128xf32>
    %95 = arith.addf %91, %94 : vector<8x128xf32>
    %cst_29 = arith.constant 0.000000e+00 : f32
    %96 = vector.broadcast %cst_29 : f32 to vector<8x128xf32>
    %97 = arith.select %12, %95, %96 : vector<8x128xi1>, vector<8x128xf32>
    %cst_30 = arith.constant 2.000000e+01 : f32
    %98 = vector.broadcast %cst_30 : f32 to vector<8x128xf32>
    %99 = arith.minimumf %97, %98 : vector<8x128xf32>
    %100 = math.exp %99 : vector<8x128xf32>
    %cst_31 = arith.constant 2.000000e+00 : f32
    %101 = vector.broadcast %cst_31 : f32 to vector<8x128xf32>
    %102 = arith.addf %100, %101 : vector<8x128xf32>
    %103 = arith.mulf %100, %102 : vector<8x128xf32>
    %cst_32 = arith.constant 2.000000e+01 : f32
    %104 = vector.broadcast %cst_32 : f32 to vector<8x128xf32>
    %105 = arith.cmpf ogt, %97, %104 : vector<8x128xf32>
    %106 = arith.mulf %97, %103 : vector<8x128xf32>
    %cst_33 = arith.constant 2.000000e+00 : f32
    %107 = vector.broadcast %cst_33 : f32 to vector<8x128xf32>
    %108 = arith.addf %103, %107 : vector<8x128xf32>
    %109 = arith.divf %106, %108 : vector<8x128xf32>
    %110 = arith.select %105, %97, %109 : vector<8x128xi1>, vector<8x128xf32>
    %cst_34 = arith.constant dense<0.000000e+00> : vector<128xf32>
    %111 = vector.multi_reduction <add>, %110, %cst_34 [0] : vector<8x128xf32> to vector<128xf32>
    %112 = vector.shape_cast %111 : vector<128xf32> to vector<1x128xf32>
    %113 = vector.extract_strided_slice %112 {offsets = [0, 0], sizes = [1, 32], strides = [1, 1]} : vector<1x128xf32> to vector<1x32xf32>
    %114 = vector.extract_strided_slice %112 {offsets = [0, 32], sizes = [1, 32], strides = [1, 1]} : vector<1x128xf32> to vector<1x32xf32>
    %115 = arith.addf %113, %114 : vector<1x32xf32>
    %116 = vector.extract_strided_slice %112 {offsets = [0, 64], sizes = [1, 32], strides = [1, 1]} : vector<1x128xf32> to vector<1x32xf32>
    %117 = arith.addf %115, %116 : vector<1x32xf32>
    %118 = vector.extract_strided_slice %112 {offsets = [0, 96], sizes = [1, 32], strides = [1, 1]} : vector<1x128xf32> to vector<1x32xf32>
    %119 = arith.addf %117, %118 : vector<1x32xf32>
    %cst_35 = arith.constant 3.125000e-02 : f32
    %120 = vector.broadcast %cst_35 : f32 to vector<1x32xf32>
    %121 = arith.mulf %119, %120 : vector<1x32xf32>
    %122 = tpu.concatenate %121, %121, %121, %121 in 1 : vector<1x32xf32>, vector<1x32xf32>, vector<1x32xf32>, vector<1x32xf32> -> vector<1x128xf32>
    %123 = vector.broadcast %122 : vector<1x128xf32> to vector<8x128xf32>
    %124 = arith.subf %110, %123 : vector<8x128xf32>
    %125 = arith.mulf %124, %124 : vector<8x128xf32>
    %cst_36 = arith.constant dense<0.000000e+00> : vector<128xf32>
    %126 = vector.multi_reduction <add>, %125, %cst_36 [0] : vector<8x128xf32> to vector<128xf32>
    %127 = vector.shape_cast %126 : vector<128xf32> to vector<1x128xf32>
    %128 = vector.extract_strided_slice %127 {offsets = [0, 0], sizes = [1, 32], strides = [1, 1]} : vector<1x128xf32> to vector<1x32xf32>
    %129 = vector.extract_strided_slice %127 {offsets = [0, 32], sizes = [1, 32], strides = [1, 1]} : vector<1x128xf32> to vector<1x32xf32>
    %130 = arith.addf %128, %129 : vector<1x32xf32>
    %131 = vector.extract_strided_slice %127 {offsets = [0, 64], sizes = [1, 32], strides = [1, 1]} : vector<1x128xf32> to vector<1x32xf32>
    %132 = arith.addf %130, %131 : vector<1x32xf32>
    %133 = vector.extract_strided_slice %127 {offsets = [0, 96], sizes = [1, 32], strides = [1, 1]} : vector<1x128xf32> to vector<1x32xf32>
    %134 = arith.addf %132, %133 : vector<1x32xf32>
    %cst_37 = arith.constant 3.125000e-02 : f32
    %135 = vector.broadcast %cst_37 : f32 to vector<1x32xf32>
    %136 = arith.mulf %134, %135 : vector<1x32xf32>
    %cst_38 = arith.constant 9.99999974E-6 : f32
    %137 = vector.broadcast %cst_38 : f32 to vector<1x32xf32>
    %138 = arith.addf %136, %137 : vector<1x32xf32>
    %139 = math.rsqrt %138 : vector<1x32xf32>
    %140 = tpu.concatenate %139, %139, %139, %139 in 1 : vector<1x32xf32>, vector<1x32xf32>, vector<1x32xf32>, vector<1x32xf32> -> vector<1x128xf32>
    %c1_39 = arith.constant 1 : index
    %c0_40 = arith.constant 0 : index
    %c0_41 = arith.constant 0 : index
    %141 = vector.load %arg3[%c1_39, %c0_40, %c0_41] : memref<2x1x128xf32, #tpu.memory_space<vmem>>, vector<1x1x128xf32>
    %142 = vector.shape_cast %141 : vector<1x1x128xf32> to vector<1x128xf32>
    %143 = arith.mulf %140, %142 : vector<1x128xf32>
    %144 = vector.broadcast %143 : vector<1x128xf32> to vector<8x128xf32>
    %145 = arith.mulf %124, %144 : vector<8x128xf32>
    %c1_42 = arith.constant 1 : index
    %c0_43 = arith.constant 0 : index
    %c0_44 = arith.constant 0 : index
    %146 = vector.load %arg4[%c1_42, %c0_43, %c0_44] : memref<2x1x128xf32, #tpu.memory_space<vmem>>, vector<1x1x128xf32>
    %147 = vector.shape_cast %146 : vector<1x1x128xf32> to vector<1x128xf32>
    %148 = vector.broadcast %147 : vector<1x128xf32> to vector<8x128xf32>
    %149 = arith.addf %145, %148 : vector<8x128xf32>
    %c0_45 = arith.constant 0 : index
    %c0_46 = arith.constant 0 : index
    %150 = vector.load %arg0[%c0_45, %c0_46] : memref<8x128xf32, #tpu.memory_space<vmem>>, vector<8x128xf32>
    %151 = arith.addf %150, %149 : vector<8x128xf32>
    %c0_47 = arith.constant 0 : index
    %c0_48 = arith.constant 0 : index
    %152 = vector.load %arg5[%c0_47, %c0_48] : memref<8x128xf32, #tpu.memory_space<vmem>>, vector<8x128xf32>
    tpu.vector_store %arg5[%c0_47, %c0_48], %151 {strides = array<i32>} : memref<8x128xf32, #tpu.memory_space<vmem>>, vector<8x128xf32>,
    return
  }
}

</mosaic_0001>

<llo_original>
// kernel: tpu_custom_call.1
$region0: #{tpu_custom_call.1}
  #allocation0 [shape = 'u32[]', space=smem, size = 0x4, offset = 0x4, fixed_abs, tag = 'smem constant byte address 0x4 - core index']
  #allocation1 [shape = 'u32[144,128]{1,0:T(1,128)}', space=vmem, size = 0x12000, scoped, tag = 'internal scratch']
  %s0 = inlined_call_operand.hbm [shape: f32[8,128], index: 0, kind: input, shape index: {}]
  %s1 = inlined_call_operand.hbm [shape: f32[2,384,128], index: 1, kind: input, shape index: {}]
  %s2 = inlined_call_operand.vmem [shape: f32[2,1,128], index: 2, kind: input, shape index: {}]
  %s3 = inlined_call_operand.vmem [shape: f32[2,1,128], index: 3, kind: input, shape index: {}]
  %s4 = inlined_call_operand.vmem [shape: f32[2,1,128], index: 4, kind: input, shape index: {}]
  %s5 = inlined_call_operand.hbm [shape: f32[8,128], index: 5, kind: output, shape index: {}]
  %s6 = sld [smem:[#allocation0]]
  $region38: #{tpu_custom_call.1} parent=0
    _
  %s8 = ssub.s32 1, %s6
  %s9 = scalar_select 0, %s8, %s6
  $region1: #{tpu_custom_call.1} parent=0
    #allocation2 [shape = 'u8[4096]{0}', space=vmem, size = 0x1000, scoped, tag = 'input window, operand 0, single buffered']
    #allocation3 [shape = 's32[1]{0}', space=sflag, size = 0x4, scoped, tag = 'scoped memory for tpu_custom_call.1']
    #allocation4 [shape = 's32[1]{0}', space=sflag, size = 0x4, scoped, tag = 'scoped memory for tpu_custom_call.1']
    #allocation5 [shape = 'u8[393216]{0}', space=vmem, size = 0x60000, scoped, tag = 'input window, operand 1, single buffered']
    #allocation6 [shape = 's32[1]{0}', space=sflag, size = 0x4, scoped, tag = 'scoped memory for tpu_custom_call.1']
    #allocation7 [shape = 'u8[4096]{0}', space=vmem, size = 0x1000, scoped, tag = 'output window, operand 0, single buffered']
    %10 = vsyncpa [#allocation3], 0
    %11 = vsyncpa [#allocation6], 0
    %12 = vsyncpa [#allocation4], 0
    // Predicated region
    $region2: #{tpu_custom_call.1} parent=1 // pred_check
      _
    $region3: #{tpu_custom_call.1} parent=1 // pred_check_branch
      %14 = sbr.rel (0) target = $region5
    $region4: #{tpu_custom_call.1} parent=1 // pred_region
      %s16 = ssub.s32 128, 128
      %17 = vsyncadd [#allocation3], %s16
      %s19 = sshll.u32 [#allocation2], 4
      %s20 = int_to_ptr.vmem [resolvable:$true] %s19
      %22 = dma.hbm_to_vmem [thread:$0]  %s0, 128, %s20, [#allocation3]
    $region5: #{tpu_custom_call.1} parent=1 // pred_fallthru
      _
    // Predicated region
    $region6: #{tpu_custom_call.1} parent=1 // pred_check
      _
    $region7: #{tpu_custom_call.1} parent=1 // pred_check_branch
      %24 = sbr.rel (0) target = $region9
    $region8: #{tpu_custom_call.1} parent=1 // pred_region
      %s26 = ssub.s32 12288, 12288
      %27 = vsyncadd [#allocation6], %s26
      %s28 = sshll.u32 [#allocation5], 4
      %s29 = int_to_ptr.vmem [resolvable:$true] %s28
      %34 = dma.hbm_to_vmem [thread:$0]  %s1, 12288, %s29, [#allocation6], 128, 128, 8
    $region9: #{tpu_custom_call.1} parent=1 // pred_fallthru
      _
    // Predicated region
    $region10: #{tpu_custom_call.1} parent=1 // pred_check
      _
    $region11: #{tpu_custom_call.1} parent=1 // pred_check_branch
      %36 = sbr.rel (0) target = $region13
    $region12: #{tpu_custom_call.1} parent=1 // pred_region
      _
    $region13: #{tpu_custom_call.1} parent=1 // pred_fallthru
      _
    // Predicated region
    $region14: #{tpu_custom_call.1} parent=1 // pred_check
      _
    $region15: #{tpu_custom_call.1} parent=1 // pred_check_branch
      %38 = sbr.rel (0) target = $region17
    $region16: #{tpu_custom_call.1} parent=1 // pred_region
      _
    $region17: #{tpu_custom_call.1} parent=1 // pred_fallthru
      _
    // Predicated region
    $region18: #{tpu_custom_call.1} parent=1 // pred_check
      _
    $region19: #{tpu_custom_call.1} parent=1 // pred_check_branch
      %40 = sbr.rel (0) target = $region21
    $region20: #{tpu_custom_call.1} parent=1 // pred_region
      _
    $region21: #{tpu_custom_call.1} parent=1 // pred_fallthru
      _
    // Predicated region
    $region22: #{tpu_custom_call.1} parent=1 // pred_check
      _
    $region23: #{tpu_custom_call.1} parent=1 // pred_check_branch
      %42 = sbr.rel (0) target = $region25
    $region24: #{tpu_custom_call.1} parent=1 // pred_region
      %43 = dma.done [#allocation3], 128
    $region25: #{tpu_custom_call.1} parent=1 // pred_fallthru
      _
    // Predicated region
    $region26: #{tpu_custom_call.1} parent=1 // pred_check
      _
    $region27: #{tpu_custom_call.1} parent=1 // pred_check_branch
      %45 = sbr.rel (0) target = $region29
    $region28: #{tpu_custom_call.1} parent=1 // pred_region
      %46 = dma.done [#allocation6], 12288
    $region29: #{tpu_custom_call.1} parent=1 // pred_fallthru
      _
    %v47 = vlaneseq
    %v48 = vshrl.u32 %v47, 7
    %v49 = vlaneseq
    %v50 = vand.u32 %v49, 127
    %v51 = vmul.u32 %v48, 128
    %v52 = vcombine.high %v50, %v50
    %v53 = vadd.s32 %v51, %v50
    %v54 = vadd.s32 %v51, %v52
    %vm55 = vcmp.ge.s32.totalorder %v53, 64
    %vm56 = vcmp.ge.s32.totalorder %v54, 64
    %vm57 = vcmp.lt.s32.totalorder %v53, 448
    %vm58 = vcmp.lt.s32.totalorder %v54, 448
    %vm59 = vmand %vm55, %vm57
    %vm60 = vmand %vm56, %vm58
    %v61 = vld [vmem:[#allocation2] sm:$0xff]
    %v63 = vrot.slane %v61, 7
    %vm65 = vcmask 1040384
    %v66 = vsel %vm65, %v63, %v63
    %v67 = vrot.slane %v61, 1
    %vm69 = vcmask 1046528
    %v70 = vsel %vm69, %v67, %v67
    %v71 = vld [vmem:[#allocation5] sm:$0xff]
    %v72 = vld [vmem:[#allocation5 + $0x8] sm:$0xff]
    %v73 = vld [vmem:[#allocation5 + $0x10] sm:$0xff]
    %v74 = vld [vmem:[#allocation5 + $0x18] sm:$0xff]
    %v75 = vld [vmem:[#allocation5 + $0x20] sm:$0xff]
    %v76 = vld [vmem:[#allocation5 + $0x28] sm:$0xff]
    %v77 = vld [vmem:[#allocation5 + $0x30] sm:$0xff]
    %v78 = vld [vmem:[#allocation5 + $0x38] sm:$0xff]
    %v79 = vld [vmem:[#allocation5 + $0x40] sm:$0xff]
    %v80 = vld [vmem:[#allocation5 + $0x48] sm:$0xff]
    %v81 = vld [vmem:[#allocation5 + $0x50] sm:$0xff]
    %v82 = vld [vmem:[#allocation5 + $0x58] sm:$0xff]
    %v83 = vld [vmem:[#allocation5 + $0x60] sm:$0xff]
    %v84 = vld [vmem:[#allocation5 + $0x68] sm:$0xff]
    %v85 = vld [vmem:[#allocation5 + $0x70] sm:$0xff]
    %v86 = vld [vmem:[#allocation5 + $0x78] sm:$0xff]
    %v87 = vld [vmem:[#allocation5 + $0x80] sm:$0xff]
    %v88 = vld [vmem:[#allocation5 + $0x88] sm:$0xff]
    %v89 = vld [vmem:[#allocation5 + $0x90] sm:$0xff]
    %v90 = vld [vmem:[#allocation5 + $0x98] sm:$0xff]
    %v91 = vld [vmem:[#allocation5 + $0xa0] sm:$0xff]
    %v92 = vld [vmem:[#allocation5 + $0xa8] sm:$0xff]
    %v93 = vld [vmem:[#allocation5 + $0xb0] sm:$0xff]
    %v94 = vld [vmem:[#allocation5 + $0xb8] sm:$0xff]
    %v95 = vld [vmem:[#allocation5 + $0xc0] sm:$0xff]
    %v96 = vld [vmem:[#allocation5 + $0xc8] sm:$0xff]
    %v97 = vld [vmem:[#allocation5 + $0xd0] sm:$0xff]
    %v98 = vld [vmem:[#allocation5 + $0xd8] sm:$0xff]
    %v99 = vld [vmem:[#allocation5 + $0xe0] sm:$0xff]
    %v100 = vld [vmem:[#allocation5 + $0xe8] sm:$0xff]
    %v101 = vld [vmem:[#allocation5 + $0xf0] sm:$0xff]
    %v102 = vld [vmem:[#allocation5 + $0xf8] sm:$0xff]
    %v103 = vld [vmem:[#allocation5 + $0x100] sm:$0xff]
    %v104 = vld [vmem:[#allocation5 + $0x108] sm:$0xff]
    %v105 = vld [vmem:[#allocation5 + $0x110] sm:$0xff]
    %v106 = vld [vmem:[#allocation5 + $0x118] sm:$0xff]
    %v107 = vld [vmem:[#allocation5 + $0x120] sm:$0xff]
    %v108 = vld [vmem:[#allocation5 + $0x128] sm:$0xff]
    %v109 = vld [vmem:[#allocation5 + $0x130] sm:$0xff]
    %v110 = vld [vmem:[#allocation5 + $0x138] sm:$0xff]
    %v111 = vld [vmem:[#allocation5 + $0x140] sm:$0xff]
    %v112 = vld [vmem:[#allocation5 + $0x148] sm:$0xff]
    %v113 = vld [vmem:[#allocation5 + $0x150] sm:$0xff]
    %v114 = vld [vmem:[#allocation5 + $0x158] sm:$0xff]
    %v115 = vld [vmem:[#allocation5 + $0x160] sm:$0xff]
    %v116 = vld [vmem:[#allocation5 + $0x168] sm:$0xff]
    %v117 = vld [vmem:[#allocation5 + $0x170] sm:$0xff]
    %v118 = vld [vmem:[#allocation5 + $0x178] sm:$0xff]
    %v119 = vld [vmem:[%s2] sm:$0x1]
    %v121 = vlaneseq
    %v122 = vshrl.u32 %v121, 7
    %v123 = vsub.s32 0, %v122
    %v124 = vrot.slane %v119, %v123
    %126 = vmatprep.subr.mxu0 0.0
    %127 = vmatpush1.msra.mxu0 %v71
    %128 = vmatprep.subr.mxu0 0.0
    %129 = vmatpush1.msra.mxu0 %v72
    %130 = vmatprep.subr.mxu0 0.0
    %131 = vmatpush1.msra.mxu0 %v73
    %132 = vmatprep.subr.mxu0 0.0
    %133 = vmatpush1.msra.mxu0 %v74
    %134 = vmatprep.subr.mxu0 0.0
    %135 = vmatpush1.msra.mxu0 %v75
    %136 = vmatprep.subr.mxu0 0.0
    %137 = vmatpush1.msra.mxu0 %v76
    %138 = vmatprep.subr.mxu0 0.0
    %139 = vmatpush1.msra.mxu0 %v77
    %140 = vmatprep.subr.mxu0 0.0
    %141 = vmatpush1.msra.mxu0 %v78
    %142 = vmatprep.subr.mxu0 0.0
    %143 = vmatpush1.msra.mxu0 %v79
    %144 = vmatprep.subr.mxu0 0.0
    %145 = vmatpush1.msra.mxu0 %v80
    %146 = vmatprep.subr.mxu0 0.0
    %147 = vmatpush1.msra.mxu0 %v81
    %148 = vmatprep.subr.mxu0 0.0
    %149 = vmatpush1.msra.mxu0 %v82
    %150 = vmatprep.subr.mxu0 0.0
    %151 = vmatpush1.msra.mxu0 %v83
    %152 = vmatprep.subr.mxu0 0.0
    %153 = vmatpush1.msra.mxu0 %v84
    %154 = vmatprep.subr.mxu0 0.0
    %155 = vmatpush1.msra.mxu0 %v85
    %156 = vmatprep.subr.mxu0 0.0
    %157 = vmatpush1.msra.mxu0 %v86
    %158 = vmatprep.subr.mxu0 0.0
    %159 = vmatpush1.msra.mxu0 %v87
    %160 = vmatprep.subr.mxu0 0.0
    %161 = vmatpush1.msra.mxu0 %v88
    %162 = vmatprep.subr.mxu0 0.0
    %163 = vmatpush1.msra.mxu0 %v89
    %164 = vmatprep.subr.mxu0 0.0
    %165 = vmatpush1.msra.mxu0 %v90
    %166 = vmatprep.subr.mxu0 0.0
    %167 = vmatpush1.msra.mxu0 %v91
    %168 = vmatprep.subr.mxu0 0.0
    %169 = vmatpush1.msra.mxu0 %v92
    %170 = vmatprep.subr.mxu0 0.0
    %171 = vmatpush1.msra.mxu0 %v93
    %172 = vmatprep.subr.mxu0 0.0
    %173 = vmatpush1.msra.mxu0 %v94
    %174 = vmatprep.subr.mxu0 0.0
    %175 = vmatpush1.msra.mxu0 %v95
    %176 = vmatprep.subr.mxu0 0.0
    %177 = vmatpush1.msra.mxu0 %v96
    %178 = vmatprep.subr.mxu0 0.0
    %179 = vmatpush1.msra.mxu0 %v97
    %180 = vmatprep.subr.mxu0 0.0
    %181 = vmatpush1.msra.mxu0 %v98
    %182 = vmatprep.subr.mxu0 0.0
    %183 = vmatpush1.msra.mxu0 %v99
    %184 = vmatprep.subr.mxu0 0.0
    %185 = vmatpush1.msra.mxu0 %v100
    %186 = vmatprep.subr.mxu0 0.0
    %187 = vmatpush1.msra.mxu0 %v101
    %188 = vmatprep.subr.mxu0 0.0
    %189 = vmatpush1.msra.mxu0 %v102
    %190 = vmatprep.mubr.f32.mxu0 %v61
    %191 = vmatmul.mubr.f32.gmra.mrb[0].mxu0 %v66
    %v192 = vpop.f32.mrb[0].mxu0
    %v193 = vadd.f32 %v124, %v192
    %v194 = vpop.f32.mrb[0].mxu0
    %195 = vdwg.mxu0
    %196 = vmatprep.subr.mxu0 0.0
    %197 = vmatpush1.msra.mxu0 %v103
    %198 = vmatprep.subr.mxu0 0.0
    %199 = vmatpush1.msra.mxu0 %v104
    %200 = vmatprep.subr.mxu0 0.0
    %201 = vmatpush1.msra.mxu0 %v105
    %202 = vmatprep.subr.mxu0 0.0
    %203 = vmatpush1.msra.mxu0 %v106
    %204 = vmatprep.subr.mxu0 0.0
    %205 = vmatpush1.msra.mxu0 %v107
    %206 = vmatprep.subr.mxu0 0.0
    %207 = vmatpush1.msra.mxu0 %v108
    %208 = vmatprep.subr.mxu0 0.0
    %209 = vmatpush1.msra.mxu0 %v109
    %210 = vmatprep.subr.mxu0 0.0
    %211 = vmatpush1.msra.mxu0 %v110
    %212 = vmatprep.subr.mxu0 0.0
    %213 = vmatpush1.msra.mxu0 %v111
    %214 = vmatprep.subr.mxu0 0.0
    %215 = vmatpush1.msra.mxu0 %v112
    %216 = vmatprep.subr.mxu0 0.0
    %217 = vmatpush1.msra.mxu0 %v113
    %218 = vmatprep.subr.mxu0 0.0
    %219 = vmatpush1.msra.mxu0 %v114
    %220 = vmatprep.subr.mxu0 0.0
    %221 = vmatpush1.msra.mxu0 %v115
    %222 = vmatprep.subr.mxu0 0.0
    %223 = vmatpush1.msra.mxu0 %v116
    %224 = vmatprep.subr.mxu0 0.0
    %225 = vmatpush1.msra.mxu0 %v117
    %226 = vmatprep.subr.mxu0 0.0
    %227 = vmatpush1.msra.mxu0 %v118
    %228 = vmatprep.subr.mxu0 0.0
    %229 = vmatpush1.msra.mxu0 0.0
    %230 = vmatprep.subr.mxu0 0.0
    %231 = vmatpush1.msra.mxu0 0.0
    %232 = vmatprep.subr.mxu0 0.0
    %233 = vmatpush1.msra.mxu0 0.0
    %234 = vmatprep.subr.mxu0 0.0
    %235 = vmatpush1.msra.mxu0 0.0
    %236 = vmatprep.subr.mxu0 0.0
    %237 = vmatpush1.msra.mxu0 0.0
    %238 = vmatprep.subr.mxu0 0.0
    %239 = vmatpush1.msra.mxu0 0.0
    %240 = vmatprep.subr.mxu0 0.0
    %241 = vmatpush1.msra.mxu0 0.0
    %242 = vmatprep.subr.mxu0 0.0
    %243 = vmatpush1.msra.mxu0 0.0
    %244 = vmatprep.subr.mxu0 0.0
    %245 = vmatpush1.msra.mxu0 0.0
    %246 = vmatprep.subr.mxu0 0.0
    %247 = vmatpush1.msra.mxu0 0.0
    %248 = vmatprep.subr.mxu0 0.0
    %249 = vmatpush1.msra.mxu0 0.0
    %250 = vmatprep.subr.mxu0 0.0
    %251 = vmatpush1.msra.mxu0 0.0
    %252 = vmatprep.subr.mxu0 0.0
    %253 = vmatpush1.msra.mxu0 0.0
    %254 = vmatprep.subr.mxu0 0.0
    %255 = vmatpush1.msra.mxu0 0.0
    %256 = vmatprep.subr.mxu0 0.0
    %257 = vmatpush1.msra.mxu0 0.0
    %258 = vmatprep.subr.mxu0 0.0
    %259 = vmatpush1.msra.mxu0 0.0
    %260 = vmatprep.mubr.f32.mxu0 0.0
    %261 = vmatmul.mubr.f32.gmra.mrb[0].mxu0 %v70
    %v262 = vpop.f32.mrb[0].mxu0
    %v263 = vadd.f32 %v193, %v262
    %v264 = vpop.f32.mrb[0].mxu0
    %265 = vdwg.mxu0
    %v267 = vcombine.high %v263, %v263
    %v269 = vsel %vm59, %v263, 0.0
    %v270 = vsel %vm60, %v267, 0.0
    %v271 = vmin.f32 %v269, 20.0
    %v272 = vmin.f32 %v270, 20.0
    %v273 = vmul.f32 %v271, 1.442695
    %v274 = vpow.pop %v273
    %v275 = vmul.f32 %v272, 1.442695
    %v276 = vpow.pop %v275
    %v277 = vadd.f32 %v274, 2.0
    %v278 = vadd.f32 %v276, 2.0
    %v279 = vmul.f32 %v274, %v277
    %v280 = vmul.f32 %v276, %v278
    %vm281 = vcmp.gt.f32.partialorder %v269, 20.0
    %vm282 = vcmp.gt.f32.partialorder %v270, 20.0
    %v283 = vmul.f32 %v269, %v279
    %v284 = vmul.f32 %v270, %v280
    %v285 = vadd.f32 %v279, 2.0
    %v286 = vadd.f32 %v280, 2.0
    %v287 = vrcp.pop %v285
    %v288 = vmul.f32 %v283, %v287
    %v289 = vrcp.pop %v286
    %v290 = vmul.f32 %v284, %v289
    %v291 = vsel %vm281, %v269, %v288
    %v292 = vsel %vm282, %v270, %v290
    %v295 = vcombine.low %v291, %v292
    %v297 = vrot.slane %v295, 4
    %v298 = vadd.f32 %v295, %v297
    %v299 = vrot.slane %v298, 2
    %v300 = vadd.f32 %v298, %v299
    %v301 = vrot.slane %v300, 1
    %v302 = vadd.f32 %v300, %v301
    %304 = vrot.lane.b32.xlu0 %v302, 96
    %v305 = vpop.permute.xlu0 %304
    %v307 = vadd.f32 %v302, %v305
    %308 = vrot.lane.b32.xlu0 %v302, 64
    %v309 = vpop.permute.xlu0 %308
    %v311 = vadd.f32 %v307, %v309
    %312 = vrot.lane.b32.xlu0 %v302, 32
    %v313 = vpop.permute.xlu0 %312
    %v315 = vadd.f32 %v311, %v313
    %v316 = vmul.f32 %v315, 0.03125
    %318 = vrot.lane.b32.xlu0 %v316, 32
    %v319 = vpop.permute.xlu0 %318
    %321 = vrot.lane.b32.xlu0 %v316, 64
    %v322 = vpop.permute.xlu0 %321
    %324 = vrot.lane.b32.xlu0 %v316, 96
    %v325 = vpop.permute.xlu0 %324
    %vm327 = vcmask 261120
    %v328 = vsel %vm327, %v316, %v319
    %vm329 = vcmask 523264
    %v330 = vsel %vm329, %v328, %v322
    %vm331 = vcmask 785408
    %v332 = vsel %vm331, %v330, %v325
    %v333 = vlaneseq
    %v334 = vshrl.u32 %v333, 7
    %v335 = vsub.s32 0, %v334
    %v336 = vrot.slane %v332, %v335
    %v338 = vcombine.high %v336, %v336
    %v340 = vsub.f32 %v291, %v336
    %v341 = vsub.f32 %v292, %v338
    %v342 = vmul.f32 %v340, %v340
    %v343 = vmul.f32 %v341, %v341
    %v346 = vcombine.low %v342, %v343
    %v348 = vrot.slane %v346, 4
    %v349 = vadd.f32 %v346, %v348
    %v350 = vrot.slane %v349, 2
    %v351 = vadd.f32 %v349, %v350
    %v352 = vrot.slane %v351, 1
    %v353 = vadd.f32 %v351, %v352
    %355 = vrot.lane.b32.xlu0 %v353, 96
    %v356 = vpop.permute.xlu0 %355
    %v358 = vadd.f32 %v353, %v356
    %359 = vrot.lane.b32.xlu0 %v353, 64
    %v360 = vpop.permute.xlu0 %359
    %v362 = vadd.f32 %v358, %v360
    %363 = vrot.lane.b32.xlu0 %v353, 32
    %v364 = vpop.permute.xlu0 %363
    %v366 = vadd.f32 %v362, %v364
    %v367 = vmul.f32 %v366, 0.03125
    %v368 = vadd.f32 %v367, 1e-05
    %v369 = vrsqrt.pop %v368
    %371 = vrot.lane.b32.xlu0 %v369, 32
    %v372 = vpop.permute.xlu0 %371
    %374 = vrot.lane.b32.xlu0 %v369, 64
    %v375 = vpop.permute.xlu0 %374
    %377 = vrot.lane.b32.xlu0 %v369, 96
    %v378 = vpop.permute.xlu0 %377
    %v380 = vsel %vm327, %v369, %v372
    %v381 = vsel %vm329, %v380, %v375
    %v382 = vsel %vm331, %v381, %v378
    %v383 = vld [vmem:[%s3] sm:$0x1]
    %v384 = vmul.f32 %v382, %v383
    %v385 = vlaneseq
    %v386 = vshrl.u32 %v385, 7
    %v387 = vsub.s32 0, %v386
    %v388 = vrot.slane %v384, %v387
    %v390 = vcombine.high %v388, %v388
    %v392 = vmul.f32 %v340, %v388
    %v393 = vmul.f32 %v341, %v390
    %v394 = vld [vmem:[%s4] sm:$0x1]
    %v396 = vlaneseq
    %v397 = vshrl.u32 %v396, 7
    %v398 = vsub.s32 0, %v397
    %v399 = vrot.slane %v394, %v398
    %v401 = vcombine.high %v399, %v399
    %v403 = vadd.f32 %v392, %v399
    %v404 = vadd.f32 %v393, %v401
    %v406 = vlaneseq
    %v407 = vshrl.u32 %v406, 7
    %v408 = vsub.s32 3, %v407
    %v409 = vrot.slane %v404, %v408
    %v412 = vcombine.low %v403, %v404
    %v413 = vrot.slane %v412, 7
    %v415 = vsel %vm65, %v409, %v413
    %v416 = vrot.slane %v412, 1
    %v418 = vlaneseq
    %v419 = vshrl.u32 %v418, 7
    %v420 = vsub.s32 0, %v419
    %v421 = vrot.slane %v403, %v420
    %v423 = vsel %vm69, %v416, %v421
    %s425 = scalar_lea.vmem [#allocation5], 384
    %v426 = vld [vmem:[%s425] sm:$0xff]
    %v427 = vld [vmem:[%s425 + $0x8] sm:$0xff]
    %v428 = vld [vmem:[%s425 + $0x10] sm:$0xff]
    %v429 = vld [vmem:[%s425 + $0x18] sm:$0xff]
    %v430 = vld [vmem:[%s425 + $0x20] sm:$0xff]
    %v431 = vld [vmem:[%s425 + $0x28] sm:$0xff]
    %v432 = vld [vmem:[%s425 + $0x30] sm:$0xff]
    %v433 = vld [vmem:[%s425 + $0x38] sm:$0xff]
    %v434 = vld [vmem:[%s425 + $0x40] sm:$0xff]
    %v435 = vld [vmem:[%s425 + $0x48] sm:$0xff]
    %v436 = vld [vmem:[%s425 + $0x50] sm:$0xff]
    %v437 = vld [vmem:[%s425 + $0x58] sm:$0xff]
    %v438 = vld [vmem:[%s425 + $0x60] sm:$0xff]
    %v439 = vld [vmem:[%s425 + $0x68] sm:$0xff]
    %v440 = vld [vmem:[%s425 + $0x70] sm:$0xff]
    %v441 = vld [vmem:[%s425 + $0x78] sm:$0xff]
    %v442 = vld [vmem:[%s425 + $0x80] sm:$0xff]
    %v443 = vld [vmem:[%s425 + $0x88] sm:$0xff]
    %v444 = vld [vmem:[%s425 + $0x90] sm:$0xff]
    %v445 = vld [vmem:[%s425 + $0x98] sm:$0xff]
    %v446 = vld [vmem:[%s425 + $0xa0] sm:$0xff]
    %v447 = vld [vmem:[%s425 + $0xa8] sm:$0xff]
    %v448 = vld [vmem:[%s425 + $0xb0] sm:$0xff]
    %v449 = vld [vmem:[%s425 + $0xb8] sm:$0xff]
    %v450 = vld [vmem:[%s425 + $0xc0] sm:$0xff]
    %v451 = vld [vmem:[%s425 + $0xc8] sm:$0xff]
    %v452 = vld [vmem:[%s425 + $0xd0] sm:$0xff]
    %v453 = vld [vmem:[%s425 + $0xd8] sm:$0xff]
    %v454 = vld [vmem:[%s425 + $0xe0] sm:$0xff]
    %v455 = vld [vmem:[%s425 + $0xe8] sm:$0xff]
    %v456 = vld [vmem:[%s425 + $0xf0] sm:$0xff]
    %v457 = vld [vmem:[%s425 + $0xf8] sm:$0xff]
    %v458 = vld [vmem:[%s425 + $0x100] sm:$0xff]
    %v459 = vld [vmem:[%s425 + $0x108] sm:$0xff]
    %v460 = vld [vmem:[%s425 + $0x110] sm:$0xff]
    %v461 = vld [vmem:[%s425 + $0x118] sm:$0xff]
    %v462 = vld [vmem:[%s425 + $0x120] sm:$0xff]
    %v463 = vld [vmem:[%s425 + $0x128] sm:$0xff]
    %v464 = vld [vmem:[%s425 + $0x130] sm:$0xff]
    %v465 = vld [vmem:[%s425 + $0x138] sm:$0xff]
    %v466 = vld [vmem:[%s425 + $0x140] sm:$0xff]
    %v467 = vld [vmem:[%s425 + $0x148] sm:$0xff]
    %v468 = vld [vmem:[%s425 + $0x150] sm:$0xff]
    %v469 = vld [vmem:[%s425 + $0x158] sm:$0xff]
    %v470 = vld [vmem:[%s425 + $0x160] sm:$0xff]
    %v471 = vld [vmem:[%s425 + $0x168] sm:$0xff]
    %v472 = vld [vmem:[%s425 + $0x170] sm:$0xff]
    %v473 = vld [vmem:[%s425 + $0x178] sm:$0xff]
    %s474 = scalar_lea.vmem %s2, 1
    %v475 = vld [vmem:[%s474] sm:$0x1]
    %v477 = vlaneseq
    %v478 = vshrl.u32 %v477, 7
    %v479 = vsub.s32 0, %v478
    %v480 = vrot.slane %v475, %v479
    %482 = vmatprep.subr.mxu0 0.0
    %483 = vmatpush1.msra.mxu0 %v426
    %484 = vmatprep.subr.mxu0 0.0
    %485 = vmatpush1.msra.mxu0 %v427
    %486 = vmatprep.subr.mxu0 0.0
    %487 = vmatpush1.msra.mxu0 %v428
    %488 = vmatprep.subr.mxu0 0.0
    %489 = vmatpush1.msra.mxu0 %v429
    %490 = vmatprep.subr.mxu0 0.0
    %491 = vmatpush1.msra.mxu0 %v430
    %492 = vmatprep.subr.mxu0 0.0
    %493 = vmatpush1.msra.mxu0 %v431
    %494 = vmatprep.subr.mxu0 0.0
    %495 = vmatpush1.msra.mxu0 %v432
    %496 = vmatprep.subr.mxu0 0.0
    %497 = vmatpush1.msra.mxu0 %v433
    %498 = vmatprep.subr.mxu0 0.0
    %499 = vmatpush1.msra.mxu0 %v434
    %500 = vmatprep.subr.mxu0 0.0
    %501 = vmatpush1.msra.mxu0 %v435
    %502 = vmatprep.subr.mxu0 0.0
    %503 = vmatpush1.msra.mxu0 %v436
    %504 = vmatprep.subr.mxu0 0.0
    %505 = vmatpush1.msra.mxu0 %v437
    %506 = vmatprep.subr.mxu0 0.0
    %507 = vmatpush1.msra.mxu0 %v438
    %508 = vmatprep.subr.mxu0 0.0
    %509 = vmatpush1.msra.mxu0 %v439
    %510 = vmatprep.subr.mxu0 0.0
    %511 = vmatpush1.msra.mxu0 %v440
    %512 = vmatprep.subr.mxu0 0.0
    %513 = vmatpush1.msra.mxu0 %v441
    %514 = vmatprep.subr.mxu0 0.0
    %515 = vmatpush1.msra.mxu0 %v442
    %516 = vmatprep.subr.mxu0 0.0
    %517 = vmatpush1.msra.mxu0 %v443
    %518 = vmatprep.subr.mxu0 0.0
    %519 = vmatpush1.msra.mxu0 %v444
    %520 = vmatprep.subr.mxu0 0.0
    %521 = vmatpush1.msra.mxu0 %v445
    %522 = vmatprep.subr.mxu0 0.0
    %523 = vmatpush1.msra.mxu0 %v446
    %524 = vmatprep.subr.mxu0 0.0
    %525 = vmatpush1.msra.mxu0 %v447
    %526 = vmatprep.subr.mxu0 0.0
    %527 = vmatpush1.msra.mxu0 %v448
    %528 = vmatprep.subr.mxu0 0.0
    %529 = vmatpush1.msra.mxu0 %v449
    %530 = vmatprep.subr.mxu0 0.0
    %531 = vmatpush1.msra.mxu0 %v450
    %532 = vmatprep.subr.mxu0 0.0
    %533 = vmatpush1.msra.mxu0 %v451
    %534 = vmatprep.subr.mxu0 0.0
    %535 = vmatpush1.msra.mxu0 %v452
    %536 = vmatprep.subr.mxu0 0.0
    %537 = vmatpush1.msra.mxu0 %v453
    %538 = vmatprep.subr.mxu0 0.0
    %539 = vmatpush1.msra.mxu0 %v454
    %540 = vmatprep.subr.mxu0 0.0
    %541 = vmatpush1.msra.mxu0 %v455
    %542 = vmatprep.subr.mxu0 0.0
    %543 = vmatpush1.msra.mxu0 %v456
    %544 = vmatprep.subr.mxu0 0.0
    %545 = vmatpush1.msra.mxu0 %v457
    %546 = vmatprep.mubr.f32.mxu0 %v412
    %547 = vmatmul.mubr.f32.gmra.mrb[0].mxu0 %v415
    %v548 = vpop.f32.mrb[0].mxu0
    %v549 = vadd.f32 %v480, %v548
    %v550 = vpop.f32.mrb[0].mxu0
    %551 = vdwg.mxu0
    %552 = vmatprep.subr.mxu0 0.0
    %553 = vmatpush1.msra.mxu0 %v458
    %554 = vmatprep.subr.mxu0 0.0
    %555 = vmatpush1.msra.mxu0 %v459
    %556 = vmatprep.subr.mxu0 0.0
    %557 = vmatpush1.msra.mxu0 %v460
    %558 = vmatprep.subr.mxu0 0.0
    %559 = vmatpush1.msra.mxu0 %v461
    %560 = vmatprep.subr.mxu0 0.0
    %561 = vmatpush1.msra.mxu0 %v462
    %562 = vmatprep.subr.mxu0 0.0
    %563 = vmatpush1.msra.mxu0 %v463
    %564 = vmatprep.subr.mxu0 0.0
    %565 = vmatpush1.msra.mxu0 %v464
    %566 = vmatprep.subr.mxu0 0.0
    %567 = vmatpush1.msra.mxu0 %v465
    %568 = vmatprep.subr.mxu0 0.0
    %569 = vmatpush1.msra.mxu0 %v466
    %570 = vmatprep.subr.mxu0 0.0
    %571 = vmatpush1.msra.mxu0 %v467
    %572 = vmatprep.subr.mxu0 0.0
    %573 = vmatpush1.msra.mxu0 %v468
    %574 = vmatprep.subr.mxu0 0.0
    %575 = vmatpush1.msra.mxu0 %v469
    %576 = vmatprep.subr.mxu0 0.0
    %577 = vmatpush1.msra.mxu0 %v470
    %578 = vmatprep.subr.mxu0 0.0
    %579 = vmatpush1.msra.mxu0 %v471
    %580 = vmatprep.subr.mxu0 0.0
    %581 = vmatpush1.msra.mxu0 %v472
    %582 = vmatprep.subr.mxu0 0.0
    %583 = vmatpush1.msra.mxu0 %v473
    %584 = vmatprep.subr.mxu0 0.0
    %585 = vmatpush1.msra.mxu0 0.0
    %586 = vmatprep.subr.mxu0 0.0
    %587 = vmatpush1.msra.mxu0 0.0
    %588 = vmatprep.subr.mxu0 0.0
    %589 = vmatpush1.msra.mxu0 0.0
    %590 = vmatprep.subr.mxu0 0.0
    %591 = vmatpush1.msra.mxu0 0.0
    %592 = vmatprep.subr.mxu0 0.0
    %593 = vmatpush1.msra.mxu0 0.0
    %594 = vmatprep.subr.mxu0 0.0
    %595 = vmatpush1.msra.mxu0 0.0
    %596 = vmatprep.subr.mxu0 0.0
    %597 = vmatpush1.msra.mxu0 0.0
    %598 = vmatprep.subr.mxu0 0.0
    %599 = vmatpush1.msra.mxu0 0.0
    %600 = vmatprep.subr.mxu0 0.0
    %601 = vmatpush1.msra.mxu0 0.0
    %602 = vmatprep.subr.mxu0 0.0
    %603 = vmatpush1.msra.mxu0 0.0
    %604 = vmatprep.subr.mxu0 0.0
    %605 = vmatpush1.msra.mxu0 0.0
    %606 = vmatprep.subr.mxu0 0.0
    %607 = vmatpush1.msra.mxu0 0.0
    %608 = vmatprep.subr.mxu0 0.0
    %609 = vmatpush1.msra.mxu0 0.0
    %610 = vmatprep.subr.mxu0 0.0
    %611 = vmatpush1.msra.mxu0 0.0
    %612 = vmatprep.subr.mxu0 0.0
    %613 = vmatpush1.msra.mxu0 0.0
    %614 = vmatprep.subr.mxu0 0.0
    %615 = vmatpush1.msra.mxu0 0.0
    %616 = vmatprep.mubr.f32.mxu0 0.0
    %617 = vmatmul.mubr.f32.gmra.mrb[0].mxu0 %v423
    %v618 = vpop.f32.mrb[0].mxu0
    %v619 = vadd.f32 %v549, %v618
    %v620 = vpop.f32.mrb[0].mxu0
    %621 = vdwg.mxu0
    %v623 = vcombine.high %v619, %v619
    %v625 = vsel %vm59, %v619, 0.0
    %v626 = vsel %vm60, %v623, 0.0
    %v627 = vmin.f32 %v625, 20.0
    %v628 = vmin.f32 %v626, 20.0
    %v629 = vmul.f32 %v627, 1.442695
    %v630 = vpow.pop %v629
    %v631 = vmul.f32 %v628, 1.442695
    %v632 = vpow.pop %v631
    %v633 = vadd.f32 %v630, 2.0
    %v634 = vadd.f32 %v632, 2.0
    %v635 = vmul.f32 %v630, %v633
    %v636 = vmul.f32 %v632, %v634
    %vm637 = vcmp.gt.f32.partialorder %v625, 20.0
    %vm638 = vcmp.gt.f32.partialorder %v626, 20.0
    %v639 = vmul.f32 %v625, %v635
    %v640 = vmul.f32 %v626, %v636
    %v641 = vadd.f32 %v635, 2.0
    %v642 = vadd.f32 %v636, 2.0
    %v643 = vrcp.pop %v641
    %v644 = vmul.f32 %v639, %v643
    %v645 = vrcp.pop %v642
    %v646 = vmul.f32 %v640, %v645
    %v647 = vsel %vm637, %v625, %v644
    %v648 = vsel %vm638, %v626, %v646
    %v651 = vcombine.low %v647, %v648
    %v653 = vrot.slane %v651, 4
    %v654 = vadd.f32 %v651, %v653
    %v655 = vrot.slane %v654, 2
    %v656 = vadd.f32 %v654, %v655
    %v657 = vrot.slane %v656, 1
    %v658 = vadd.f32 %v656, %v657
    %660 = vrot.lane.b32.xlu0 %v658, 96
    %v661 = vpop.permute.xlu0 %660
    %v663 = vadd.f32 %v658, %v661
    %664 = vrot.lane.b32.xlu0 %v658, 64
    %v665 = vpop.permute.xlu0 %664
    %v667 = vadd.f32 %v663, %v665
    %668 = vrot.lane.b32.xlu0 %v658, 32
    %v669 = vpop.permute.xlu0 %668
    %v671 = vadd.f32 %v667, %v669
    %v672 = vmul.f32 %v671, 0.03125
    %674 = vrot.lane.b32.xlu0 %v672, 32
    %v675 = vpop.permute.xlu0 %674
    %677 = vrot.lane.b32.xlu0 %v672, 64
    %v678 = vpop.permute.xlu0 %677
    %680 = vrot.lane.b32.xlu0 %v672, 96
    %v681 = vpop.permute.xlu0 %680
    %v683 = vsel %vm327, %v672, %v675
    %v684 = vsel %vm329, %v683, %v678
    %v685 = vsel %vm331, %v684, %v681
    %v686 = vlaneseq
    %v687 = vshrl.u32 %v686, 7
    %v688 = vsub.s32 0, %v687
    %v689 = vrot.slane %v685, %v688
    %v691 = vcombine.high %v689, %v689
    %v693 = vsub.f32 %v647, %v689
    %v694 = vsub.f32 %v648, %v691
    %v695 = vmul.f32 %v693, %v693
    %v696 = vmul.f32 %v694, %v694
    %v699 = vcombine.low %v695, %v696
    %v701 = vrot.slane %v699, 4
    %v702 = vadd.f32 %v699, %v701
    %v703 = vrot.slane %v702, 2
    %v704 = vadd.f32 %v702, %v703
    %v705 = vrot.slane %v704, 1
    %v706 = vadd.f32 %v704, %v705
    %708 = vrot.lane.b32.xlu0 %v706, 96
    %v709 = vpop.permute.xlu0 %708
    %v711 = vadd.f32 %v706, %v709
    %712 = vrot.lane.b32.xlu0 %v706, 64
    %v713 = vpop.permute.xlu0 %712
    %v715 = vadd.f32 %v711, %v713
    %716 = vrot.lane.b32.xlu0 %v706, 32
    %v717 = vpop.permute.xlu0 %716
    %v719 = vadd.f32 %v715, %v717
    %v720 = vmul.f32 %v719, 0.03125
    %v721 = vadd.f32 %v720, 1e-05
    %v722 = vrsqrt.pop %v721
    %724 = vrot.lane.b32.xlu0 %v722, 32
    %v725 = vpop.permute.xlu0 %724
    %727 = vrot.lane.b32.xlu0 %v722, 64
    %v728 = vpop.permute.xlu0 %727
    %730 = vrot.lane.b32.xlu0 %v722, 96
    %v731 = vpop.permute.xlu0 %730
    %v733 = vsel %vm327, %v722, %v725
    %v734 = vsel %vm329, %v733, %v728
    %v735 = vsel %vm331, %v734, %v731
    %s736 = scalar_lea.vmem %s3, 1
    %v737 = vld [vmem:[%s736] sm:$0x1]
    %v738 = vmul.f32 %v735, %v737
    %v739 = vlaneseq
    %v740 = vshrl.u32 %v739, 7
    %v741 = vsub.s32 0, %v740
    %v742 = vrot.slane %v738, %v741
    %v744 = vcombine.high %v742, %v742
    %v746 = vmul.f32 %v693, %v742
    %v747 = vmul.f32 %v694, %v744
    %s748 = scalar_lea.vmem %s4, 1
    %v749 = vld [vmem:[%s748] sm:$0x1]
    %v751 = vlaneseq
    %v752 = vshrl.u32 %v751, 7
    %v753 = vsub.s32 0, %v752
    %v754 = vrot.slane %v749, %v753
    %v756 = vcombine.high %v754, %v754
    %v758 = vadd.f32 %v746, %v754
    %v759 = vadd.f32 %v747, %v756
    %v762 = vcombine.low %v758, %v759
    %v764 = vadd.f32 %v61, %v762
    %765 = vst [vmem:[#allocation7] sm:$0xff] %v764
    // Predicated region
    $region30: #{tpu_custom_call.1} parent=1 // pred_check
      _
    $region31: #{tpu_custom_call.1} parent=1 // pred_check_branch
      %767 = sbr.rel (0) target = $region33
    $region32: #{tpu_custom_call.1} parent=1 // pred_region
      %s769 = ssub.s32 128, 128
      %770 = vsyncadd [#allocation4], %s769
      %s772 = sshll.u32 [#allocation7], 4
      %s773 = int_to_ptr.vmem [resolvable:$true] %s772
      %775 = dma.vmem_to_hbm [thread:$0]  %s773, 128, %s5, [#allocation4]
    $region33: #{tpu_custom_call.1} parent=1 // pred_fallthru
      _
    // Predicated region
    $region34: #{tpu_custom_call.1} parent=1 // pred_check
      _
    $region35: #{tpu_custom_call.1} parent=1 // pred_check_branch
      %777 = sbr.rel (0) target = $region37
    $region36: #{tpu_custom_call.1} parent=1 // pred_region
      %778 = dma.done [#allocation4], 128
    $region37: #{tpu_custom_call.1} parent=1 // pred_fallthru
      _
    %779 = vsyncpa [#allocation3], 1
    %780 = vsyncpa [#allocation6], 1
    %781 = vsyncpa [#allocation4], 1

</llo_original>
